<compile_context>
chip_gen: v7x
topology: tpu7x:2x2x1
jax: 0.10.0
libtpu: 0.0.40
codegen_flags: <defaults>
</compile_context>

<pallas_src>
import jax
import jax.numpy as jnp
from jax.experimental import pallas as pl
from jax.experimental.pallas import tpu as pltpu

# Small, TPU-friendly synthetic sizes.
B, S, H, F, V = 2, 8, 32, 64, 128


# ----------------------------------------------------------------------------
# Fused kernel: embedding combine + both PLM branches (stacked along batch).
# Everything fits comfortably in VMEM, so there is no grid at all.
# ----------------------------------------------------------------------------
def _fused_dual_plm_kernel(issue_ref, share_ref, rev_ref,
                           wqkv_ref, wo_ref, w1_ref, w2_ref, wh_ref,
                           logits_ref):
    b, s, h = issue_ref.shape
    nb = 2 * b
    v = logits_ref.shape[-1]

    issue = issue_ref[...]          # [B, S, H] f32
    share = share_ref[...]          # [B, S, H] f32
    rev = rev_ref[...]              # [B, S, H] f32 (ReverseLayerF fwd == identity)

    # Branch 0: averaged embeddings.  Branch 1: gradient-reversed share embeds.
    avg2d = ((issue + share) * 0.5).reshape(b * s, h)
    rev2d = rev.reshape(b * s, h)
    x2d = jnp.concatenate([avg2d, rev2d], axis=0)        # [2B*S, H] f32

    # Fused QKV projection: bf16 MXU inputs, f32 accumulation.
    qkv = jnp.dot(x2d.astype(jnp.bfloat16), wqkv_ref[...],
                  preferred_element_type=jnp.float32)    # [2B*S, 3H]
    q = qkv[:, 0 * h:1 * h].reshape(nb, s, h).astype(jnp.bfloat16)
    k = qkv[:, 1 * h:2 * h].reshape(nb, s, h).astype(jnp.bfloat16)
    vv = qkv[:, 2 * h:3 * h].reshape(nb, s, h).astype(jnp.bfloat16)

    # Attention scores: contract on the last dim of both operands (no k.T).
    scale = 1.0 / jnp.sqrt(jnp.float32(h))
    scores = jnp.einsum('bqd,bkd->bqk', q, k,
                        preferred_element_type=jnp.float32) * scale   # [2B, S, S]

    # Numerically stable softmax in f32; denominator reciprocal on the EUP.
    m = jnp.max(scores, axis=-1, keepdims=True)
    p = jnp.exp(scores - m)
    attn = p * pl.reciprocal(jnp.sum(p, axis=-1, keepdims=True), approx=True)

    ctx = jnp.einsum('bqk,bkd->bqd', attn.astype(jnp.bfloat16), vv,
                     preferred_element_type=jnp.float32)              # [2B, S, H]
    attn_out = jnp.dot(ctx.reshape(nb * s, h).astype(jnp.bfloat16), wo_ref[...],
                       preferred_element_type=jnp.float32)
    h1 = x2d + attn_out                                               # residual (f32)

    ff = jnp.dot(h1.astype(jnp.bfloat16), w1_ref[...],
                 preferred_element_type=jnp.float32)                  # [2B*S, F]
    # TODO(synk): PyTorch nn.GELU defaults to the exact erf form; the tanh
    # approximation is used here for a cheap TPU lowering (tiny numeric delta).
    ff = jax.nn.gelu(ff, approximate=True)
    ff = jnp.dot(ff.astype(jnp.bfloat16), w2_ref[...],
                 preferred_element_type=jnp.float32)                  # [2B*S, H]
    h2 = h1 + ff                                                      # residual (f32)

    # LM head.  NOTE: at realistic H/V scale, wh and the logits output should
    # be tiled along V (lane-dense multiples of 128) to respect v7x's 64 MiB VMEM.
    logits = jnp.dot(h2.astype(jnp.bfloat16), wh_ref[...],
                     preferred_element_type=jnp.float32)              # [2B*S, V]
    logits_ref[...] = logits.reshape(nb, s, v)


def fused_dual_plm_forward(issue_embeds, share_embeds, rev_embeds, params):
    b, s, h = issue_embeds.shape
    v = params["wh"].shape[1]

    # Fuse Wq/Wk/Wv into one [H, 3H] weight and cast all weights to bf16 once
    # at the pallas_call boundary (halves weight DMA; dots accumulate in f32).
    wqkv = jnp.concatenate(
        [params["wq"], params["wk"], params["wv"]], axis=1).astype(jnp.bfloat16)
    wo = params["wo"].astype(jnp.bfloat16)
    w1 = params["w1"].astype(jnp.bfloat16)
    w2 = params["w2"].astype(jnp.bfloat16)
    wh = params["wh"].astype(jnp.bfloat16)

    vmem = pl.BlockSpec(memory_space=pltpu.MemorySpace.VMEM)
    logits = pl.pallas_call(
        _fused_dual_plm_kernel,
        out_shape=jax.ShapeDtypeStruct((2 * b, s, v), jnp.float32),
        in_specs=[vmem] * 8,
        out_specs=vmem,
    )(issue_embeds, share_embeds, rev_embeds, wqkv, wo, w1, w2, wh)

    # Split the stacked branches back out.
    return logits[:b], logits[b:]


# ----------------------------------------------------------------------------
# Gradient-reversal layer: identity in the forward pass, -alpha * grad in the
# backward pass (only forward semantics are exercised here).
# ----------------------------------------------------------------------------
@jax.custom_vjp
def reverse_layer(x, alpha):
    return x


def _rev_fwd(x, alpha):
    return x, alpha


def _rev_bwd(alpha, g):
    return (-alpha * g, None)


reverse_layer.defvjp(_rev_fwd, _rev_bwd)


# ----------------------------------------------------------------------------
# Synthetic templates: shared token-embedding lookup + per-template soft prompt
# offset (stand-in for PtuningTemplate.process_batch; gather stays plain JAX).
# ----------------------------------------------------------------------------
def template_process_batch(input_ids, embed_table, prompt):
    tok = jnp.take(embed_table, input_ids, axis=0)        # [B, S, H]
    return tok + prompt[None, :, :]


# ----------------------------------------------------------------------------
# Full PromptDiffDANNModel.forward equivalent.
# ----------------------------------------------------------------------------
def prompt_diff_dann_forward(input_ids, params, alpha):
    # templates (issue / share)
    out1 = template_process_batch(input_ids, params["embed"], params["prompt_issue"])
    out2 = template_process_batch(input_ids, params["embed"], params["prompt_share"])

    # share branch goes through gradient reversal (identity forward)
    rev_embeds = reverse_layer(out2, alpha)

    # single fused launch: (issue+share)/2 -> PLM  and  rev(share) -> PLM
    outputs, outputs2 = fused_dual_plm_forward(out1, out2, rev_embeds, params)

    # TODO(synk): PLM also returns hidden_states / attentions and the template
    # applies post_processing_outputs; only the logits hot path is modeled here.
    return outputs, outputs2, out1, out2


def init_params(key):
    ks = jax.random.split(key, 10)
    scale = 0.02
    return {
        "embed": scale * jax.random.normal(ks[0], (V, H), jnp.float32),
        "prompt_issue": scale * jax.random.normal(ks[1], (S, H), jnp.float32),
        "prompt_share": scale * jax.random.normal(ks[2], (S, H), jnp.float32),
        "wq": scale * jax.random.normal(ks[3], (H, H), jnp.float32),
        "wk": scale * jax.random.normal(ks[4], (H, H), jnp.float32),
        "wv": scale * jax.random.normal(ks[5], (H, H), jnp.float32),
        "wo": scale * jax.random.normal(ks[6], (H, H), jnp.float32),
        "w1": scale * jax.random.normal(ks[7], (H, F), jnp.float32),
        "w2": scale * jax.random.normal(ks[8], (F, H), jnp.float32),
        "wh": scale * jax.random.normal(ks[9], (H, V), jnp.float32),
    }


if __name__ == "__main__":
    key = jax.random.PRNGKey(0)
    pkey, dkey = jax.random.split(key)
    params = init_params(pkey)
    input_ids = jax.random.randint(dkey, (B, S), 0, V, dtype=jnp.int32)
    alpha = jnp.float32(0.5)

    fwd = jax.jit(prompt_diff_dann_forward)
    outputs, outputs2, out1, out2 = fwd(input_ids, params, alpha)
    jax.block_until_ready((outputs, outputs2, out1, out2))

    assert outputs.shape == (B, S, V)
    assert outputs2.shape == (B, S, V)
    assert out1.shape == (B, S, H)
    assert out2.shape == (B, S, H)
    assert bool(jnp.all(jnp.isfinite(outputs))) and bool(jnp.all(jnp.isfinite(outputs2)))
    print("KERNEL_OK")
</pallas_src>

<mosaic_0001>
module attributes {stable_mosaic.version = 11 : i64} {
  func.func @_fused_dual_plm_kernel(%arg0: memref<2x8x32xf32, #tpu.memory_space<vmem>>, %arg1: memref<2x8x32xf32, #tpu.memory_space<vmem>>, %arg2: memref<2x8x32xf32, #tpu.memory_space<vmem>>, %arg3: memref<32x96xbf16, #tpu.memory_space<vmem>>, %arg4: memref<32x32xbf16, #tpu.memory_space<vmem>>, %arg5: memref<32x64xbf16, #tpu.memory_space<vmem>>, %arg6: memref<64x32xbf16, #tpu.memory_space<vmem>>, %arg7: memref<32x128xbf16, #tpu.memory_space<vmem>>, %arg8: memref<4x8x128xf32, #tpu.memory_space<vmem>>) attributes {dimension_semantics = [], scalar_prefetch = 0 : i64, scratch_operands = 0 : i64, tpu.core_type = #tpu.core_type<tc>} {
    %c0 = arith.constant 0 : index
    %c0_0 = arith.constant 0 : index
    %c0_1 = arith.constant 0 : index
    %0 = vector.load %arg0[%c0, %c0_0, %c0_1] : memref<2x8x32xf32, #tpu.memory_space<vmem>>, vector<2x8x32xf32>
    %c0_2 = arith.constant 0 : index
    %c0_3 = arith.constant 0 : index
    %c0_4 = arith.constant 0 : index
    %1 = vector.load %arg1[%c0_2, %c0_3, %c0_4] : memref<2x8x32xf32, #tpu.memory_space<vmem>>, vector<2x8x32xf32>
    %c0_5 = arith.constant 0 : index
    %c0_6 = arith.constant 0 : index
    %c0_7 = arith.constant 0 : index
    %2 = vector.load %arg2[%c0_5, %c0_6, %c0_7] : memref<2x8x32xf32, #tpu.memory_space<vmem>>, vector<2x8x32xf32>
    %3 = arith.addf %0, %1 : vector<2x8x32xf32>
    %cst = arith.constant 5.000000e-01 : f32
    %4 = vector.broadcast %cst : f32 to vector<2x8x32xf32>
    %5 = arith.mulf %3, %4 : vector<2x8x32xf32>
    %6 = vector.shape_cast %5 : vector<2x8x32xf32> to vector<16x32xf32>
    %7 = vector.shape_cast %2 : vector<2x8x32xf32> to vector<16x32xf32>
    %8 = tpu.concatenate %6, %7 in 0 : vector<16x32xf32>, vector<16x32xf32> -> vector<32x32xf32>
    %9 = arith.truncf %8 : vector<32x32xf32> to vector<32x32xbf16>
    %c0_8 = arith.constant 0 : index
    %c0_9 = arith.constant 0 : index
    %10 = vector.load %arg3[%c0_8, %c0_9] : memref<32x96xbf16, #tpu.memory_space<vmem>>, vector<32x96xbf16>
    %cst_10 = arith.constant dense<0.000000e+00> : vector<32x96xf32>
    %11 = tpu.matmul %9, %10, %cst_10 {dimension_numbers = #tpu.dot_dimension_numbers<[1], [0], [0], [1], [0, 0, 1, 1], [], []>} : vector<32x32xbf16>, vector<32x96xbf16>, vector<32x96xf32> -> vector<32x96xf32>
    %12 = vector.extract_strided_slice %11 {offsets = [0, 0], sizes = [32, 32], strides = [1, 1]} : vector<32x96xf32> to vector<32x32xf32>
    %13 = vector.shape_cast %12 : vector<32x32xf32> to vector<4x8x32xf32>
    %14 = arith.truncf %13 : vector<4x8x32xf32> to vector<4x8x32xbf16>
    %15 = vector.extract_strided_slice %11 {offsets = [0, 32], sizes = [32, 32], strides = [1, 1]} : vector<32x96xf32> to vector<32x32xf32>
    %16 = vector.shape_cast %15 : vector<32x32xf32> to vector<4x8x32xf32>
    %17 = arith.truncf %16 : vector<4x8x32xf32> to vector<4x8x32xbf16>
    %18 = vector.extract_strided_slice %11 {offsets = [0, 64], sizes = [32, 32], strides = [1, 1]} : vector<32x96xf32> to vector<32x32xf32>
    %19 = vector.shape_cast %18 : vector<32x32xf32> to vector<4x8x32xf32>
    %20 = arith.truncf %19 : vector<4x8x32xf32> to vector<4x8x32xbf16>
    %cst_11 = arith.constant 3.200000e+01 : f32
    %21 = math.sqrt %cst_11 : f32
    %cst_12 = arith.constant 1.000000e+00 : f32
    %22 = arith.divf %cst_12, %21 : f32
    "tpu.trace_start"() <{level = 10 : i32, message = "bqd,bkd->bqk"}> : () -> ()
    %cst_13 = arith.constant dense<0.000000e+00> : vector<4x8x8xf32>
    %23 = tpu.matmul %14, %17, %cst_13 {dimension_numbers = #tpu.dot_dimension_numbers<[2], [2], [1], [1], [0, 0, 0, 1, 1, 1], [0], [0]>} : vector<4x8x32xbf16>, vector<4x8x32xbf16>, vector<4x8x8xf32> -> vector<4x8x8xf32>
    "tpu.trace_stop"() : () -> ()
    %24 = vector.broadcast %22 : f32 to vector<4x8x8xf32>
    %25 = arith.mulf %23, %24 : vector<4x8x8xf32>
    %cst_14 = arith.constant dense<0xFF800000> : vector<4x8xf32>
    %26 = vector.multi_reduction <maximumf>, %25, %cst_14 [2] : vector<4x8x8xf32> to vector<4x8xf32>
    %27 = vector.shape_cast %26 : vector<4x8xf32> to vector<4x8x1xf32>
    %28 = vector.broadcast %27 : vector<4x8x1xf32> to vector<4x8x8xf32>
    %29 = arith.subf %25, %28 : vector<4x8x8xf32>
    %30 = math.exp %29 : vector<4x8x8xf32>
    %cst_15 = arith.constant dense<0.000000e+00> : vector<4x8xf32>
    %31 = vector.multi_reduction <add>, %30, %cst_15 [2] : vector<4x8x8xf32> to vector<4x8xf32>
    %32 = vector.shape_cast %31 : vector<4x8xf32> to vector<4x8x1xf32>
    %33 = tpu.reciprocal %32 {approx = true} : vector<4x8x1xf32> -> vector<4x8x1xf32>
    %34 = vector.broadcast %33 : vector<4x8x1xf32> to vector<4x8x8xf32>
    %35 = arith.mulf %30, %34 : vector<4x8x8xf32>
    %36 = arith.truncf %35 : vector<4x8x8xf32> to vector<4x8x8xbf16>
    "tpu.trace_start"() <{level = 10 : i32, message = "bqk,bkd->bqd"}> : () -> ()
    %cst_16 = arith.constant dense<0.000000e+00> : vector<4x8x32xf32>
    %37 = tpu.matmul %36, %20, %cst_16 {dimension_numbers = #tpu.dot_dimension_numbers<[2], [1], [1], [2], [0, 0, 0, 1, 1, 2], [0], [0]>} : vector<4x8x8xbf16>, vector<4x8x32xbf16>, vector<4x8x32xf32> -> vector<4x8x32xf32>
    "tpu.trace_stop"() : () -> ()
    %38 = vector.shape_cast %37 : vector<4x8x32xf32> to vector<32x32xf32>
    %39 = arith.truncf %38 : vector<32x32xf32> to vector<32x32xbf16>
    %c0_17 = arith.constant 0 : index
    %c0_18 = arith.constant 0 : index
    %40 = vector.load %arg4[%c0_17, %c0_18] : memref<32x32xbf16, #tpu.memory_space<vmem>>, vector<32x32xbf16>
    %cst_19 = arith.constant dense<0.000000e+00> : vector<32x32xf32>
    %41 = tpu.matmul %39, %40, %cst_19 {dimension_numbers = #tpu.dot_dimension_numbers<[1], [0], [0], [1], [0, 0, 1, 1], [], []>} : vector<32x32xbf16>, vector<32x32xbf16>, vector<32x32xf32> -> vector<32x32xf32>
    %42 = arith.addf %8, %41 : vector<32x32xf32>
    %43 = arith.truncf %42 : vector<32x32xf32> to vector<32x32xbf16>
    %c0_20 = arith.constant 0 : index
    %c0_21 = arith.constant 0 : index
    %44 = vector.load %arg5[%c0_20, %c0_21] : memref<32x64xbf16, #tpu.memory_space<vmem>>, vector<32x64xbf16>
    %cst_22 = arith.constant dense<0.000000e+00> : vector<32x64xf32>
    %45 = tpu.matmul %43, %44, %cst_22 {dimension_numbers = #tpu.dot_dimension_numbers<[1], [0], [0], [1], [0, 0, 1, 1], [], []>} : vector<32x32xbf16>, vector<32x64xbf16>, vector<32x64xf32> -> vector<32x64xf32>
    %46 = arith.mulf %45, %45 : vector<32x64xf32>
    %47 = arith.mulf %45, %46 : vector<32x64xf32>
    %cst_23 = arith.constant 4.471500e-02 : f32
    %48 = vector.broadcast %cst_23 : f32 to vector<32x64xf32>
    %49 = arith.mulf %48, %47 : vector<32x64xf32>
    %50 = arith.addf %45, %49 : vector<32x64xf32>
    %cst_24 = arith.constant 0.797884583 : f32
    %51 = vector.broadcast %cst_24 : f32 to vector<32x64xf32>
    %52 = arith.mulf %51, %50 : vector<32x64xf32>
    %53 = math.tanh %52 : vector<32x64xf32>
    %cst_25 = arith.constant 1.000000e+00 : f32
    %54 = vector.broadcast %cst_25 : f32 to vector<32x64xf32>
    %55 = arith.addf %54, %53 : vector<32x64xf32>
    %cst_26 = arith.constant 5.000000e-01 : f32
    %56 = vector.broadcast %cst_26 : f32 to vector<32x64xf32>
    %57 = arith.mulf %56, %55 : vector<32x64xf32>
    %58 = arith.mulf %45, %57 : vector<32x64xf32>
    %59 = arith.truncf %58 : vector<32x64xf32> to vector<32x64xbf16>
    %c0_27 = arith.constant 0 : index
    %c0_28 = arith.constant 0 : index
    %60 = vector.load %arg6[%c0_27, %c0_28] : memref<64x32xbf16, #tpu.memory_space<vmem>>, vector<64x32xbf16>
    %cst_29 = arith.constant dense<0.000000e+00> : vector<32x32xf32>
    %61 = tpu.matmul %59, %60, %cst_29 {dimension_numbers = #tpu.dot_dimension_numbers<[1], [0], [0], [1], [0, 0, 1, 1], [], []>} : vector<32x64xbf16>, vector<64x32xbf16>, vector<32x32xf32> -> vector<32x32xf32>
    %62 = arith.addf %42, %61 : vector<32x32xf32>
    %63 = arith.truncf %62 : vector<32x32xf32> to vector<32x32xbf16>
    %c0_30 = arith.constant 0 : index
    %c0_31 = arith.constant 0 : index
    %64 = vector.load %arg7[%c0_30, %c0_31] : memref<32x128xbf16, #tpu.memory_space<vmem>>, vector<32x128xbf16>
    %cst_32 = arith.constant dense<0.000000e+00> : vector<32x128xf32>
    %65 = tpu.matmul %63, %64, %cst_32 {dimension_numbers = #tpu.dot_dimension_numbers<[1], [0], [0], [1], [0, 0, 1, 1], [], []>} : vector<32x32xbf16>, vector<32x128xbf16>, vector<32x128xf32> -> vector<32x128xf32>
    %66 = vector.shape_cast %65 : vector<32x128xf32> to vector<4x8x128xf32>
    %c0_33 = arith.constant 0 : index
    %c0_34 = arith.constant 0 : index
    %c0_35 = arith.constant 0 : index
    %67 = vector.load %arg8[%c0_33, %c0_34, %c0_35] : memref<4x8x128xf32, #tpu.memory_space<vmem>>, vector<4x8x128xf32>
    tpu.vector_store %arg8[%c0_33, %c0_34, %c0_35], %66 {strides = array<i32>} : memref<4x8x128xf32, #tpu.memory_space<vmem>>, vector<4x8x128xf32>,
    return
  }
}

</mosaic_0001>

<llo_original>
// kernel: prompt_diff_dann_forward.1
$region0: #{prompt_diff_dann_forward.1}
  #allocation0 [shape = 'u32[]', space=smem, size = 0x4, offset = 0x4, fixed_abs, tag = 'smem constant byte address 0x4 - core index']
  #allocation1 [shape = 'u32[144,128]{1,0:T(1,128)}', space=vmem, size = 0x12000, scoped, tag = 'internal scratch']
  %s0 = inlined_call_operand.vmem [shape: f32[2,8,32], index: 0, kind: input, shape index: {}]
  %s1 = inlined_call_operand.vmem [shape: f32[2,8,32], index: 1, kind: input, shape index: {}, may-alias: {1,2}]
  %s2 = inlined_call_operand.vmem [shape: f32[2,8,32], index: 2, kind: input, shape index: {}, may-alias: {1,2}]
  %s3 = inlined_call_operand.vmem [shape: bf16[32,96], index: 3, kind: input, shape index: {}]
  %s4 = inlined_call_operand.vmem [shape: bf16[32,32], index: 4, kind: input, shape index: {}]
  %s5 = inlined_call_operand.vmem [shape: bf16[32,64], index: 5, kind: input, shape index: {}]
  %s6 = inlined_call_operand.vmem [shape: bf16[64,32], index: 6, kind: input, shape index: {}]
  %s7 = inlined_call_operand.vmem [shape: bf16[32,128], index: 7, kind: input, shape index: {}]
  %s8 = inlined_call_operand.vmem [shape: f32[4,8,128], index: 8, kind: output, shape index: {}]
  %s9 = sld [smem:[#allocation0]]
  $region42: #{prompt_diff_dann_forward.1} parent=0
    _
  %s11 = ssub.s32 1, %s9
  %s12 = scalar_select 0, %s11, %s9
  // Predicated region
  $region2: #{prompt_diff_dann_forward.1} parent=0 // pred_check
    _
  $region3: #{prompt_diff_dann_forward.1} parent=0 // pred_check_branch
    %14 = sbr.rel (0) target = $region5
  $region4: #{prompt_diff_dann_forward.1} parent=0 // pred_region
    _
  $region5: #{prompt_diff_dann_forward.1} parent=0 // pred_fallthru
    _
  // Predicated region
  $region6: #{prompt_diff_dann_forward.1} parent=0 // pred_check
    _
  $region7: #{prompt_diff_dann_forward.1} parent=0 // pred_check_branch
    %16 = sbr.rel (0) target = $region9
  $region8: #{prompt_diff_dann_forward.1} parent=0 // pred_region
    _
  $region9: #{prompt_diff_dann_forward.1} parent=0 // pred_fallthru
    _
  // Predicated region
  $region10: #{prompt_diff_dann_forward.1} parent=0 // pred_check
    _
  $region11: #{prompt_diff_dann_forward.1} parent=0 // pred_check_branch
    %18 = sbr.rel (0) target = $region13
  $region12: #{prompt_diff_dann_forward.1} parent=0 // pred_region
    _
  $region13: #{prompt_diff_dann_forward.1} parent=0 // pred_fallthru
    _
  // Predicated region
  $region14: #{prompt_diff_dann_forward.1} parent=0 // pred_check
    _
  $region15: #{prompt_diff_dann_forward.1} parent=0 // pred_check_branch
    %20 = sbr.rel (0) target = $region17
  $region16: #{prompt_diff_dann_forward.1} parent=0 // pred_region
    _
  $region17: #{prompt_diff_dann_forward.1} parent=0 // pred_fallthru
    _
  // Predicated region
  $region18: #{prompt_diff_dann_forward.1} parent=0 // pred_check
    _
  $region19: #{prompt_diff_dann_forward.1} parent=0 // pred_check_branch
    %22 = sbr.rel (0) target = $region21
  $region20: #{prompt_diff_dann_forward.1} parent=0 // pred_region
    _
  $region21: #{prompt_diff_dann_forward.1} parent=0 // pred_fallthru
    _
  // Predicated region
  $region22: #{prompt_diff_dann_forward.1} parent=0 // pred_check
    _
  $region23: #{prompt_diff_dann_forward.1} parent=0 // pred_check_branch
    %24 = sbr.rel (0) target = $region25
  $region24: #{prompt_diff_dann_forward.1} parent=0 // pred_region
    _
  $region25: #{prompt_diff_dann_forward.1} parent=0 // pred_fallthru
    _
  // Predicated region
  $region26: #{prompt_diff_dann_forward.1} parent=0 // pred_check
    _
  $region27: #{prompt_diff_dann_forward.1} parent=0 // pred_check_branch
    %26 = sbr.rel (0) target = $region29
  $region28: #{prompt_diff_dann_forward.1} parent=0 // pred_region
    _
  $region29: #{prompt_diff_dann_forward.1} parent=0 // pred_fallthru
    _
  // Predicated region
  $region30: #{prompt_diff_dann_forward.1} parent=0 // pred_check
    _
  $region31: #{prompt_diff_dann_forward.1} parent=0 // pred_check_branch
    %28 = sbr.rel (0) target = $region33
  $region32: #{prompt_diff_dann_forward.1} parent=0 // pred_region
    _
  $region33: #{prompt_diff_dann_forward.1} parent=0 // pred_fallthru
    _
  %v30 = vld [vmem:[%s0] sm:$0xff]
  %v31 = vld [vmem:[%s0 + $0x8] sm:$0xff]
  %v32 = vld [vmem:[%s1] sm:$0xff]
  %v33 = vld [vmem:[%s1 + $0x8] sm:$0xff]
  %v34 = vld [vmem:[%s2] sm:$0xff]
  %v35 = vld [vmem:[%s2 + $0x8] sm:$0xff]
  %v36 = vadd.f32 %v30, %v32
  %v37 = vadd.f32 %v31, %v33
  %v38 = vmul.f32 %v36, 0.5
  %v39 = vmul.f32 %v37, 0.5
  %v40 = vpack.c.bf16 %v39, %v38
  %v41 = vpack.c.bf16 %v35, %v34
  %v42 = vld [vmem:[%s3] sm:$0xf]
  %v43 = vld [vmem:[%s3 + $0x4] sm:$0xf]
  %v44 = vld [vmem:[%s3 + $0x8] sm:$0xf]
  %v45 = vld [vmem:[%s3 + $0xc] sm:$0xf]
  %v50 = vunpack.c.l.b16 %v42
  %v51 = vunpack.c.l.b16 %v43
  %v52 = vunpack.c.l.b16 %v44
  %v53 = vunpack.c.l.b16 %v45
  %v54 = vpack.c.b16 %v51, %v50
  %v55 = vpack.c.b16 %v53, %v52
  %vm58 = vcmask 261120
  %v60 = vsel %vm58, %v40, 0
  %v63 = vsel %vm58, %v41, 0
  %65 = vmatprep.subr.bf16.mxu0 0
  %66 = vmatpush1.bf16.msra.mxu0 %v54
  %67 = vmatprep.subr.bf16.mxu0 0
  %68 = vmatpush1.bf16.msra.mxu0 %v55
  %69 = vmatprep.subr.bf16.mxu0 0
  %70 = vmatpush1.bf16.msra.mxu0 0
  %71 = vmatprep.subr.bf16.mxu0 0
  %72 = vmatpush1.bf16.msra.mxu0 0
  %73 = vmatprep.subr.bf16.mxu0 0
  %74 = vmatpush1.bf16.msra.mxu0 0
  %75 = vmatprep.subr.bf16.mxu0 0
  %76 = vmatpush1.bf16.msra.mxu0 0
  %77 = vmatprep.subr.bf16.mxu0 0
  %78 = vmatpush1.bf16.msra.mxu0 0
  %79 = vmatprep.subr.bf16.mxu0 0
  %80 = vmatpush1.bf16.msra.mxu0 0
  %81 = vmatprep.subr.bf16.mxu0 0
  %82 = vmatpush1.bf16.msra.mxu0 0
  %83 = vmatprep.subr.bf16.mxu0 0
  %84 = vmatpush1.bf16.msra.mxu0 0
  %85 = vmatprep.subr.bf16.mxu0 0
  %86 = vmatpush1.bf16.msra.mxu0 0
  %87 = vmatprep.subr.bf16.mxu0 0
  %88 = vmatpush1.bf16.msra.mxu0 0
  %89 = vmatprep.subr.bf16.mxu0 0
  %90 = vmatpush1.bf16.msra.mxu0 0
  %91 = vmatprep.subr.bf16.mxu0 0
  %92 = vmatpush1.bf16.msra.mxu0 0
  %93 = vmatprep.subr.bf16.mxu0 0
  %94 = vmatpush1.bf16.msra.mxu0 0
  %95 = vmatprep.subr.bf16.mxu0 0
  %96 = vmatpush1.bf16.msra.mxu0 0
  %97 = vmatprep.mubr.bf16.mxu0 0
  %98 = vmatmul.mubr.bf16.gmra.mrb[0].mxu0 %v60
  %v99 = vpop.f32.mrb[0].mxu0
  %v100 = vadd.f32 0.0, %v99
  %v101 = vpop.f32.mrb[0].mxu0
  %v102 = vpop.f32.mrb[0].mxu0
  %v103 = vadd.f32 0.0, %v102
  %v104 = vpop.f32.mrb[0].mxu0
  %105 = vmatprep.mubr.bf16.mxu0 0
  %106 = vmatmul.mubr.bf16.gmra.mrb[0].mxu0 %v63
  %v107 = vpop.f32.mrb[0].mxu0
  %v108 = vadd.f32 0.0, %v107
  %v109 = vpop.f32.mrb[0].mxu0
  %v110 = vpop.f32.mrb[0].mxu0
  %v111 = vadd.f32 0.0, %v110
  %v112 = vpop.f32.mrb[0].mxu0
  %113 = vdwg.mxu0
  %v114 = vpack.c.bf16 %v100, %v100
  %v115 = vpack.c.bf16 %v103, %v103
  %v116 = vpack.c.bf16 %v108, %v108
  %v117 = vpack.c.bf16 %v111, %v111
  %119 = vrot.lane.b32.xlu0 %v114, 96
  %v120 = vpop.permute.xlu0 %119
  %v122 = vsel %vm58, %v114, 0
  %v125 = vsel %vm58, %v120, 0
  %127 = vmatprep.subr.bf16.mxu0 0
  %128 = vmatpush1.bf16.xpose.msra.mxu0 %v125
  %129 = vmatprep.subr.bf16.mxu0 0
  %130 = vmatpush1.bf16.xpose.msra.mxu0 0
  %131 = vmatprep.subr.bf16.mxu0 0
  %132 = vmatpush1.bf16.xpose.msra.mxu0 0
  %133 = vmatprep.subr.bf16.mxu0 0
  %134 = vmatpush1.bf16.xpose.msra.mxu0 0
  %135 = vmatprep.subr.bf16.mxu0 0
  %136 = vmatpush1.bf16.xpose.msra.mxu0 0
  %137 = vmatprep.subr.bf16.mxu0 0
  %138 = vmatpush1.bf16.xpose.msra.mxu0 0
  %139 = vmatprep.subr.bf16.mxu0 0
  %140 = vmatpush1.bf16.xpose.msra.mxu0 0
  %141 = vmatprep.subr.bf16.mxu0 0
  %142 = vmatpush1.bf16.xpose.msra.mxu0 0
  %143 = vmatprep.subr.bf16.mxu0 0
  %144 = vmatpush1.bf16.xpose.msra.mxu0 0
  %145 = vmatprep.subr.bf16.mxu0 0
  %146 = vmatpush1.bf16.xpose.msra.mxu0 0
  %147 = vmatprep.subr.bf16.mxu0 0
  %148 = vmatpush1.bf16.xpose.msra.mxu0 0
  %149 = vmatprep.subr.bf16.mxu0 0
  %150 = vmatpush1.bf16.xpose.msra.mxu0 0
  %151 = vmatprep.subr.bf16.mxu0 0
  %152 = vmatpush1.bf16.xpose.msra.mxu0 0
  %153 = vmatprep.subr.bf16.mxu0 0
  %154 = vmatpush1.bf16.xpose.msra.mxu0 0
  %155 = vmatprep.subr.bf16.mxu0 0
  %156 = vmatpush1.bf16.xpose.msra.mxu0 0
  %157 = vmatprep.subr.bf16.mxu0 0
  %158 = vmatpush1.bf16.xpose.msra.mxu0 0
  %159 = vmatprep.mubr.bf16.mxu0 0
  %160 = vmatmul.mubr.bf16.gmra.mrb[0].mxu0 %v122
  %v161 = vpop.f32.mrb[0].mxu0
  %v162 = vadd.f32 0.0, %v161
  %v163 = vpop.f32.mrb[0].mxu0
  %v164 = vpop.f32.mrb[0].mxu0
  %v165 = vpop.f32.mrb[0].mxu0
  %166 = vdwg.mxu0
  %168 = vrot.lane.b32.xlu0 %v115, 96
  %v169 = vpop.permute.xlu0 %168
  %v171 = vsel %vm58, %v115, 0
  %v174 = vsel %vm58, %v169, 0
  %176 = vmatprep.subr.bf16.mxu0 0
  %177 = vmatpush1.bf16.xpose.msra.mxu0 %v174
  %178 = vmatprep.subr.bf16.mxu0 0
  %179 = vmatpush1.bf16.xpose.msra.mxu0 0
  %180 = vmatprep.subr.bf16.mxu0 0
  %181 = vmatpush1.bf16.xpose.msra.mxu0 0
  %182 = vmatprep.subr.bf16.mxu0 0
  %183 = vmatpush1.bf16.xpose.msra.mxu0 0
  %184 = vmatprep.subr.bf16.mxu0 0
  %185 = vmatpush1.bf16.xpose.msra.mxu0 0
  %186 = vmatprep.subr.bf16.mxu0 0
  %187 = vmatpush1.bf16.xpose.msra.mxu0 0
  %188 = vmatprep.subr.bf16.mxu0 0
  %189 = vmatpush1.bf16.xpose.msra.mxu0 0
  %190 = vmatprep.subr.bf16.mxu0 0
  %191 = vmatpush1.bf16.xpose.msra.mxu0 0
  %192 = vmatprep.subr.bf16.mxu0 0
  %193 = vmatpush1.bf16.xpose.msra.mxu0 0
  %194 = vmatprep.subr.bf16.mxu0 0
  %195 = vmatpush1.bf16.xpose.msra.mxu0 0
  %196 = vmatprep.subr.bf16.mxu0 0
  %197 = vmatpush1.bf16.xpose.msra.mxu0 0
  %198 = vmatprep.subr.bf16.mxu0 0
  %199 = vmatpush1.bf16.xpose.msra.mxu0 0
  %200 = vmatprep.subr.bf16.mxu0 0
  %201 = vmatpush1.bf16.xpose.msra.mxu0 0
  %202 = vmatprep.subr.bf16.mxu0 0
  %203 = vmatpush1.bf16.xpose.msra.mxu0 0
  %204 = vmatprep.subr.bf16.mxu0 0
  %205 = vmatpush1.bf16.xpose.msra.mxu0 0
  %206 = vmatprep.subr.bf16.mxu0 0
  %207 = vmatpush1.bf16.xpose.msra.mxu0 0
  %208 = vmatprep.mubr.bf16.mxu0 0
  %209 = vmatmul.mubr.bf16.gmra.mrb[0].mxu0 %v171
  %v210 = vpop.f32.mrb[0].mxu0
  %v211 = vadd.f32 0.0, %v210
  %v212 = vpop.f32.mrb[0].mxu0
  %v213 = vpop.f32.mrb[0].mxu0
  %v214 = vpop.f32.mrb[0].mxu0
  %215 = vdwg.mxu0
  %217 = vrot.lane.b32.xlu0 %v116, 96
  %v218 = vpop.permute.xlu0 %217
  %v220 = vsel %vm58, %v116, 0
  %v223 = vsel %vm58, %v218, 0
  %225 = vmatprep.subr.bf16.mxu0 0
  %226 = vmatpush1.bf16.xpose.msra.mxu0 %v223
  %227 = vmatprep.subr.bf16.mxu0 0
  %228 = vmatpush1.bf16.xpose.msra.mxu0 0
  %229 = vmatprep.subr.bf16.mxu0 0
  %230 = vmatpush1.bf16.xpose.msra.mxu0 0
  %231 = vmatprep.subr.bf16.mxu0 0
  %232 = vmatpush1.bf16.xpose.msra.mxu0 0
  %233 = vmatprep.subr.bf16.mxu0 0
  %234 = vmatpush1.bf16.xpose.msra.mxu0 0
  %235 = vmatprep.subr.bf16.mxu0 0
  %236 = vmatpush1.bf16.xpose.msra.mxu0 0
  %237 = vmatprep.subr.bf16.mxu0 0
  %238 = vmatpush1.bf16.xpose.msra.mxu0 0
  %239 = vmatprep.subr.bf16.mxu0 0
  %240 = vmatpush1.bf16.xpose.msra.mxu0 0
  %241 = vmatprep.subr.bf16.mxu0 0
  %242 = vmatpush1.bf16.xpose.msra.mxu0 0
  %243 = vmatprep.subr.bf16.mxu0 0
  %244 = vmatpush1.bf16.xpose.msra.mxu0 0
  %245 = vmatprep.subr.bf16.mxu0 0
  %246 = vmatpush1.bf16.xpose.msra.mxu0 0
  %247 = vmatprep.subr.bf16.mxu0 0
  %248 = vmatpush1.bf16.xpose.msra.mxu0 0
  %249 = vmatprep.subr.bf16.mxu0 0
  %250 = vmatpush1.bf16.xpose.msra.mxu0 0
  %251 = vmatprep.subr.bf16.mxu0 0
  %252 = vmatpush1.bf16.xpose.msra.mxu0 0
  %253 = vmatprep.subr.bf16.mxu0 0
  %254 = vmatpush1.bf16.xpose.msra.mxu0 0
  %255 = vmatprep.subr.bf16.mxu0 0
  %256 = vmatpush1.bf16.xpose.msra.mxu0 0
  %257 = vmatprep.mubr.bf16.mxu0 0
  %258 = vmatmul.mubr.bf16.gmra.mrb[0].mxu0 %v220
  %v259 = vpop.f32.mrb[0].mxu0
  %v260 = vadd.f32 0.0, %v259
  %v261 = vpop.f32.mrb[0].mxu0
  %v262 = vpop.f32.mrb[0].mxu0
  %v263 = vpop.f32.mrb[0].mxu0
  %264 = vdwg.mxu0
  %266 = vrot.lane.b32.xlu0 %v117, 96
  %v267 = vpop.permute.xlu0 %266
  %v269 = vsel %vm58, %v117, 0
  %v272 = vsel %vm58, %v267, 0
  %274 = vmatprep.subr.bf16.mxu0 0
  %275 = vmatpush1.bf16.xpose.msra.mxu0 %v272
  %276 = vmatprep.subr.bf16.mxu0 0
  %277 = vmatpush1.bf16.xpose.msra.mxu0 0
  %278 = vmatprep.subr.bf16.mxu0 0
  %279 = vmatpush1.bf16.xpose.msra.mxu0 0
  %280 = vmatprep.subr.bf16.mxu0 0
  %281 = vmatpush1.bf16.xpose.msra.mxu0 0
  %282 = vmatprep.subr.bf16.mxu0 0
  %283 = vmatpush1.bf16.xpose.msra.mxu0 0
  %284 = vmatprep.subr.bf16.mxu0 0
  %285 = vmatpush1.bf16.xpose.msra.mxu0 0
  %286 = vmatprep.subr.bf16.mxu0 0
  %287 = vmatpush1.bf16.xpose.msra.mxu0 0
  %288 = vmatprep.subr.bf16.mxu0 0
  %289 = vmatpush1.bf16.xpose.msra.mxu0 0
  %290 = vmatprep.subr.bf16.mxu0 0
  %291 = vmatpush1.bf16.xpose.msra.mxu0 0
  %292 = vmatprep.subr.bf16.mxu0 0
  %293 = vmatpush1.bf16.xpose.msra.mxu0 0
  %294 = vmatprep.subr.bf16.mxu0 0
  %295 = vmatpush1.bf16.xpose.msra.mxu0 0
  %296 = vmatprep.subr.bf16.mxu0 0
  %297 = vmatpush1.bf16.xpose.msra.mxu0 0
  %298 = vmatprep.subr.bf16.mxu0 0
  %299 = vmatpush1.bf16.xpose.msra.mxu0 0
  %300 = vmatprep.subr.bf16.mxu0 0
  %301 = vmatpush1.bf16.xpose.msra.mxu0 0
  %302 = vmatprep.subr.bf16.mxu0 0
  %303 = vmatpush1.bf16.xpose.msra.mxu0 0
  %304 = vmatprep.subr.bf16.mxu0 0
  %305 = vmatpush1.bf16.xpose.msra.mxu0 0
  %306 = vmatprep.mubr.bf16.mxu0 0
  %307 = vmatmul.mubr.bf16.gmra.mrb[0].mxu0 %v269
  %v308 = vpop.f32.mrb[0].mxu0
  %v309 = vadd.f32 0.0, %v308
  %v310 = vpop.f32.mrb[0].mxu0
  %v311 = vpop.f32.mrb[0].mxu0
  %v312 = vpop.f32.mrb[0].mxu0
  %313 = vdwg.mxu0
  %v314 = vmul.f32 %v162, 0.17677669
  %v315 = vmul.f32 %v211, 0.17677669
  %v316 = vmul.f32 %v260, 0.17677669
  %v317 = vmul.f32 %v309, 0.17677669
  %vm318 = vcmask 64512
  %v319 = vsel %vm318, %v314, -inf
  %320 = vmax.xlane.f32.xlu0 %v319
  %v321 = vpop.xlane.xlu0 %320
  %v322 = vsel %vm318, %v315, -inf
  %323 = vmax.xlane.f32.xlu0 %v322
  %v324 = vpop.xlane.xlu0 %323
  %v325 = vsel %vm318, %v316, -inf
  %326 = vmax.xlane.f32.xlu0 %v325
  %v327 = vpop.xlane.xlu0 %326
  %v328 = vsel %vm318, %v317, -inf
  %329 = vmax.xlane.f32.xlu0 %v328
  %v330 = vpop.xlane.xlu0 %329
  %v331 = vsub.f32 %v314, %v321
  %v332 = vsub.f32 %v315, %v324
  %v333 = vsub.f32 %v316, %v327
  %v334 = vsub.f32 %v317, %v330
  %v335 = vmul.f32 %v331, 1.442695
  %v336 = vpow.pop %v335
  %v337 = vmul.f32 %v332, 1.442695
  %v338 = vpow.pop %v337
  %v339 = vmul.f32 %v333, 1.442695
  %v340 = vpow.pop %v339
  %v341 = vmul.f32 %v334, 1.442695
  %v342 = vpow.pop %v341
  %v343 = vsel %vm318, %v336, 0.0
  %344 = vadd.xlane.f32.xlu0 %v343
  %v345 = vpop.xlane.xlu0 %344
  %v346 = vsel %vm318, %v338, 0.0
  %347 = vadd.xlane.f32.xlu0 %v346
  %v348 = vpop.xlane.xlu0 %347
  %v349 = vsel %vm318, %v340, 0.0
  %350 = vadd.xlane.f32.xlu0 %v349
  %v351 = vpop.xlane.xlu0 %350
  %v352 = vsel %vm318, %v342, 0.0
  %353 = vadd.xlane.f32.xlu0 %v352
  %v354 = vpop.xlane.xlu0 %353
  %v355 = vrcp.pop %v345
  %v356 = vrcp.pop %v348
  %v357 = vrcp.pop %v351
  %v358 = vrcp.pop %v354
  %v359 = vmul.f32 %v336, %v355
  %v360 = vmul.f32 %v338, %v356
  %v361 = vmul.f32 %v340, %v357
  %v362 = vmul.f32 %v342, %v358
  %v363 = vpack.c.bf16 %v359, %v359
  %v364 = vpack.c.bf16 %v360, %v360
  %v365 = vpack.c.bf16 %v361, %v361
  %v366 = vpack.c.bf16 %v362, %v362
  %367 = vrot.lane.b32.xlu0 %v114, 64
  %v368 = vpop.permute.xlu0 %367
  %v370 = vsel %vm318, %v363, 0
  %vm372 = vcmask 1043456
  %v374 = vsel %vm372, %v368, 0
  %376 = vmatprep.subr.bf16.mxu0 0
  %377 = vmatpush1.bf16.msra.mxu0 %v374
  %378 = vmatprep.subr.bf16.mxu0 0
  %379 = vmatpush1.bf16.msra.mxu0 0
  %380 = vmatprep.subr.bf16.mxu0 0
  %381 = vmatpush1.bf16.msra.mxu0 0
  %382 = vmatprep.subr.bf16.mxu0 0
  %383 = vmatpush1.bf16.msra.mxu0 0
  %384 = vmatprep.subr.bf16.mxu0 0
  %385 = vmatpush1.bf16.msra.mxu0 0
  %386 = vmatprep.subr.bf16.mxu0 0
  %387 = vmatpush1.bf16.msra.mxu0 0
  %388 = vmatprep.subr.bf16.mxu0 0
  %389 = vmatpush1.bf16.msra.mxu0 0
  %390 = vmatprep.subr.bf16.mxu0 0
  %391 = vmatpush1.bf16.msra.mxu0 0
  %392 = vmatprep.subr.bf16.mxu0 0
  %393 = vmatpush1.bf16.msra.mxu0 0
  %394 = vmatprep.subr.bf16.mxu0 0
  %395 = vmatpush1.bf16.msra.mxu0 0
  %396 = vmatprep.subr.bf16.mxu0 0
  %397 = vmatpush1.bf16.msra.mxu0 0
  %398 = vmatprep.subr.bf16.mxu0 0
  %399 = vmatpush1.bf16.msra.mxu0 0
  %400 = vmatprep.subr.bf16.mxu0 0
  %401 = vmatpush1.bf16.msra.mxu0 0
  %402 = vmatprep.subr.bf16.mxu0 0
  %403 = vmatpush1.bf16.msra.mxu0 0
  %404 = vmatprep.subr.bf16.mxu0 0
  %405 = vmatpush1.bf16.msra.mxu0 0
  %406 = vmatprep.subr.bf16.mxu0 0
  %407 = vmatpush1.bf16.msra.mxu0 0
  %408 = vmatprep.mubr.bf16.mxu0 0
  %409 = vmatmul.mubr.bf16.gmra.mrb[0].mxu0 %v370
  %v410 = vpop.f32.mrb[0].mxu0
  %v411 = vadd.f32 0.0, %v410
  %v412 = vpop.f32.mrb[0].mxu0
  %v413 = vpop.f32.mrb[0].mxu0
  %v414 = vpop.f32.mrb[0].mxu0
  %415 = vdwg.mxu0
  %416 = vrot.lane.b32.xlu0 %v115, 64
  %v417 = vpop.permute.xlu0 %416
  %v419 = vsel %vm318, %v364, 0
  %v422 = vsel %vm372, %v417, 0
  %424 = vmatprep.subr.bf16.mxu0 0
  %425 = vmatpush1.bf16.msra.mxu0 %v422
  %426 = vmatprep.subr.bf16.mxu0 0
  %427 = vmatpush1.bf16.msra.mxu0 0
  %428 = vmatprep.subr.bf16.mxu0 0
  %429 = vmatpush1.bf16.msra.mxu0 0
  %430 = vmatprep.subr.bf16.mxu0 0
  %431 = vmatpush1.bf16.msra.mxu0 0
  %432 = vmatprep.subr.bf16.mxu0 0
  %433 = vmatpush1.bf16.msra.mxu0 0
  %434 = vmatprep.subr.bf16.mxu0 0
  %435 = vmatpush1.bf16.msra.mxu0 0
  %436 = vmatprep.subr.bf16.mxu0 0
  %437 = vmatpush1.bf16.msra.mxu0 0
  %438 = vmatprep.subr.bf16.mxu0 0
  %439 = vmatpush1.bf16.msra.mxu0 0
  %440 = vmatprep.subr.bf16.mxu0 0
  %441 = vmatpush1.bf16.msra.mxu0 0
  %442 = vmatprep.subr.bf16.mxu0 0
  %443 = vmatpush1.bf16.msra.mxu0 0
  %444 = vmatprep.subr.bf16.mxu0 0
  %445 = vmatpush1.bf16.msra.mxu0 0
  %446 = vmatprep.subr.bf16.mxu0 0
  %447 = vmatpush1.bf16.msra.mxu0 0
  %448 = vmatprep.subr.bf16.mxu0 0
  %449 = vmatpush1.bf16.msra.mxu0 0
  %450 = vmatprep.subr.bf16.mxu0 0
  %451 = vmatpush1.bf16.msra.mxu0 0
  %452 = vmatprep.subr.bf16.mxu0 0
  %453 = vmatpush1.bf16.msra.mxu0 0
  %454 = vmatprep.subr.bf16.mxu0 0
  %455 = vmatpush1.bf16.msra.mxu0 0
  %456 = vmatprep.mubr.bf16.mxu0 0
  %457 = vmatmul.mubr.bf16.gmra.mrb[0].mxu0 %v419
  %v458 = vpop.f32.mrb[0].mxu0
  %v459 = vadd.f32 0.0, %v458
  %v460 = vpop.f32.mrb[0].mxu0
  %v461 = vpop.f32.mrb[0].mxu0
  %v462 = vpop.f32.mrb[0].mxu0
  %463 = vdwg.mxu0
  %464 = vrot.lane.b32.xlu0 %v116, 64
  %v465 = vpop.permute.xlu0 %464
  %v467 = vsel %vm318, %v365, 0
  %v470 = vsel %vm372, %v465, 0
  %472 = vmatprep.subr.bf16.mxu0 0
  %473 = vmatpush1.bf16.msra.mxu0 %v470
  %474 = vmatprep.subr.bf16.mxu0 0
  %475 = vmatpush1.bf16.msra.mxu0 0
  %476 = vmatprep.subr.bf16.mxu0 0
  %477 = vmatpush1.bf16.msra.mxu0 0
  %478 = vmatprep.subr.bf16.mxu0 0
  %479 = vmatpush1.bf16.msra.mxu0 0
  %480 = vmatprep.subr.bf16.mxu0 0
  %481 = vmatpush1.bf16.msra.mxu0 0
  %482 = vmatprep.subr.bf16.mxu0 0
  %483 = vmatpush1.bf16.msra.mxu0 0
  %484 = vmatprep.subr.bf16.mxu0 0
  %485 = vmatpush1.bf16.msra.mxu0 0
  %486 = vmatprep.subr.bf16.mxu0 0
  %487 = vmatpush1.bf16.msra.mxu0 0
  %488 = vmatprep.subr.bf16.mxu0 0
  %489 = vmatpush1.bf16.msra.mxu0 0
  %490 = vmatprep.subr.bf16.mxu0 0
  %491 = vmatpush1.bf16.msra.mxu0 0
  %492 = vmatprep.subr.bf16.mxu0 0
  %493 = vmatpush1.bf16.msra.mxu0 0
  %494 = vmatprep.subr.bf16.mxu0 0
  %495 = vmatpush1.bf16.msra.mxu0 0
  %496 = vmatprep.subr.bf16.mxu0 0
  %497 = vmatpush1.bf16.msra.mxu0 0
  %498 = vmatprep.subr.bf16.mxu0 0
  %499 = vmatpush1.bf16.msra.mxu0 0
  %500 = vmatprep.subr.bf16.mxu0 0
  %501 = vmatpush1.bf16.msra.mxu0 0
  %502 = vmatprep.subr.bf16.mxu0 0
  %503 = vmatpush1.bf16.msra.mxu0 0
  %504 = vmatprep.mubr.bf16.mxu0 0
  %505 = vmatmul.mubr.bf16.gmra.mrb[0].mxu0 %v467
  %v506 = vpop.f32.mrb[0].mxu0
  %v507 = vadd.f32 0.0, %v506
  %v508 = vpop.f32.mrb[0].mxu0
  %v509 = vpop.f32.mrb[0].mxu0
  %v510 = vpop.f32.mrb[0].mxu0
  %511 = vdwg.mxu0
  %512 = vrot.lane.b32.xlu0 %v117, 64
  %v513 = vpop.permute.xlu0 %512
  %v515 = vsel %vm318, %v366, 0
  %v518 = vsel %vm372, %v513, 0
  %520 = vmatprep.subr.bf16.mxu0 0
  %521 = vmatpush1.bf16.msra.mxu0 %v518
  %522 = vmatprep.subr.bf16.mxu0 0
  %523 = vmatpush1.bf16.msra.mxu0 0
  %524 = vmatprep.subr.bf16.mxu0 0
  %525 = vmatpush1.bf16.msra.mxu0 0
  %526 = vmatprep.subr.bf16.mxu0 0
  %527 = vmatpush1.bf16.msra.mxu0 0
  %528 = vmatprep.subr.bf16.mxu0 0
  %529 = vmatpush1.bf16.msra.mxu0 0
  %530 = vmatprep.subr.bf16.mxu0 0
  %531 = vmatpush1.bf16.msra.mxu0 0
  %532 = vmatprep.subr.bf16.mxu0 0
  %533 = vmatpush1.bf16.msra.mxu0 0
  %534 = vmatprep.subr.bf16.mxu0 0
  %535 = vmatpush1.bf16.msra.mxu0 0
  %536 = vmatprep.subr.bf16.mxu0 0
  %537 = vmatpush1.bf16.msra.mxu0 0
  %538 = vmatprep.subr.bf16.mxu0 0
  %539 = vmatpush1.bf16.msra.mxu0 0
  %540 = vmatprep.subr.bf16.mxu0 0
  %541 = vmatpush1.bf16.msra.mxu0 0
  %542 = vmatprep.subr.bf16.mxu0 0
  %543 = vmatpush1.bf16.msra.mxu0 0
  %544 = vmatprep.subr.bf16.mxu0 0
  %545 = vmatpush1.bf16.msra.mxu0 0
  %546 = vmatprep.subr.bf16.mxu0 0
  %547 = vmatpush1.bf16.msra.mxu0 0
  %548 = vmatprep.subr.bf16.mxu0 0
  %549 = vmatpush1.bf16.msra.mxu0 0
  %550 = vmatprep.subr.bf16.mxu0 0
  %551 = vmatpush1.bf16.msra.mxu0 0
  %552 = vmatprep.mubr.bf16.mxu0 0
  %553 = vmatmul.mubr.bf16.gmra.mrb[0].mxu0 %v515
  %v554 = vpop.f32.mrb[0].mxu0
  %v555 = vadd.f32 0.0, %v554
  %v556 = vpop.f32.mrb[0].mxu0
  %v557 = vpop.f32.mrb[0].mxu0
  %v558 = vpop.f32.mrb[0].mxu0
  %559 = vdwg.mxu0
  %v560 = vpack.c.bf16 %v459, %v411
  %v561 = vpack.c.bf16 %v555, %v507
  %v562 = vld [vmem:[%s4] sm:$0xf]
  %v563 = vld [vmem:[%s4 + $0x4] sm:$0xf]
  %v564 = vld [vmem:[%s4 + $0x8] sm:$0xf]
  %v565 = vld [vmem:[%s4 + $0xc] sm:$0xf]
  %v570 = vunpack.c.l.b16 %v562
  %v571 = vunpack.c.l.b16 %v563
  %v572 = vunpack.c.l.b16 %v564
  %v573 = vunpack.c.l.b16 %v565
  %v574 = vpack.c.b16 %v571, %v570
  %v575 = vpack.c.b16 %v573, %v572
  %v579 = vsel %vm58, %v560, 0
  %v582 = vsel %vm58, %v561, 0
  %584 = vmatprep.subr.bf16.mxu0 0
  %585 = vmatpush1.bf16.msra.mxu0 %v574
  %586 = vmatprep.subr.bf16.mxu0 0
  %587 = vmatpush1.bf16.msra.mxu0 %v575
  %588 = vmatprep.subr.bf16.mxu0 0
  %589 = vmatpush1.bf16.msra.mxu0 0
  %590 = vmatprep.subr.bf16.mxu0 0
  %591 = vmatpush1.bf16.msra.mxu0 0
  %592 = vmatprep.subr.bf16.mxu0 0
  %593 = vmatpush1.bf16.msra.mxu0 0
  %594 = vmatprep.subr.bf16.mxu0 0
  %595 = vmatpush1.bf16.msra.mxu0 0
  %596 = vmatprep.subr.bf16.mxu0 0
  %597 = vmatpush1.bf16.msra.mxu0 0
  %598 = vmatprep.subr.bf16.mxu0 0
  %599 = vmatpush1.bf16.msra.mxu0 0
  %600 = vmatprep.subr.bf16.mxu0 0
  %601 = vmatpush1.bf16.msra.mxu0 0
  %602 = vmatprep.subr.bf16.mxu0 0
  %603 = vmatpush1.bf16.msra.mxu0 0
  %604 = vmatprep.subr.bf16.mxu0 0
  %605 = vmatpush1.bf16.msra.mxu0 0
  %606 = vmatprep.subr.bf16.mxu0 0
  %607 = vmatpush1.bf16.msra.mxu0 0
  %608 = vmatprep.subr.bf16.mxu0 0
  %609 = vmatpush1.bf16.msra.mxu0 0
  %610 = vmatprep.subr.bf16.mxu0 0
  %611 = vmatpush1.bf16.msra.mxu0 0
  %612 = vmatprep.subr.bf16.mxu0 0
  %613 = vmatpush1.bf16.msra.mxu0 0
  %614 = vmatprep.subr.bf16.mxu0 0
  %615 = vmatpush1.bf16.msra.mxu0 0
  %616 = vmatprep.mubr.bf16.mxu0 0
  %617 = vmatmul.mubr.bf16.gmra.mrb[0].mxu0 %v579
  %v618 = vpop.f32.mrb[0].mxu0
  %v619 = vadd.f32 0.0, %v618
  %v620 = vpop.f32.mrb[0].mxu0
  %v621 = vpop.f32.mrb[0].mxu0
  %v622 = vadd.f32 0.0, %v621
  %v623 = vpop.f32.mrb[0].mxu0
  %624 = vmatprep.mubr.bf16.mxu0 0
  %625 = vmatmul.mubr.bf16.gmra.mrb[0].mxu0 %v582
  %v626 = vpop.f32.mrb[0].mxu0
  %v627 = vadd.f32 0.0, %v626
  %v628 = vpop.f32.mrb[0].mxu0
  %v629 = vpop.f32.mrb[0].mxu0
  %v630 = vadd.f32 0.0, %v629
  %v631 = vpop.f32.mrb[0].mxu0
  %632 = vdwg.mxu0
  %v633 = vadd.f32 %v38, %v619
  %v634 = vadd.f32 %v39, %v622
  %v635 = vadd.f32 %v34, %v627
  %v636 = vadd.f32 %v35, %v630
  %v637 = vpack.c.bf16 %v634, %v633
  %v638 = vpack.c.bf16 %v636, %v635
  %v639 = vld [vmem:[%s5] sm:$0xf]
  %v640 = vld [vmem:[%s5 + $0x4] sm:$0xf]
  %v641 = vld [vmem:[%s5 + $0x8] sm:$0xf]
  %v642 = vld [vmem:[%s5 + $0xc] sm:$0xf]
  %v647 = vunpack.c.l.b16 %v639
  %v648 = vunpack.c.l.b16 %v640
  %v649 = vunpack.c.l.b16 %v641
  %v650 = vunpack.c.l.b16 %v642
  %v651 = vpack.c.b16 %v648, %v647
  %v652 = vpack.c.b16 %v650, %v649
  %v656 = vsel %vm58, %v637, 0
  %v659 = vsel %vm58, %v638, 0
  %661 = vmatprep.subr.bf16.mxu0 0
  %662 = vmatpush1.bf16.msra.mxu0 %v651
  %663 = vmatprep.subr.bf16.mxu0 0
  %664 = vmatpush1.bf16.msra.mxu0 %v652
  %665 = vmatprep.subr.bf16.mxu0 0
  %666 = vmatpush1.bf16.msra.mxu0 0
  %667 = vmatprep.subr.bf16.mxu0 0
  %668 = vmatpush1.bf16.msra.mxu0 0
  %669 = vmatprep.subr.bf16.mxu0 0
  %670 = vmatpush1.bf16.msra.mxu0 0
  %671 = vmatprep.subr.bf16.mxu0 0
  %672 = vmatpush1.bf16.msra.mxu0 0
  %673 = vmatprep.subr.bf16.mxu0 0
  %674 = vmatpush1.bf16.msra.mxu0 0
  %675 = vmatprep.subr.bf16.mxu0 0
  %676 = vmatpush1.bf16.msra.mxu0 0
  %677 = vmatprep.subr.bf16.mxu0 0
  %678 = vmatpush1.bf16.msra.mxu0 0
  %679 = vmatprep.subr.bf16.mxu0 0
  %680 = vmatpush1.bf16.msra.mxu0 0
  %681 = vmatprep.subr.bf16.mxu0 0
  %682 = vmatpush1.bf16.msra.mxu0 0
  %683 = vmatprep.subr.bf16.mxu0 0
  %684 = vmatpush1.bf16.msra.mxu0 0
  %685 = vmatprep.subr.bf16.mxu0 0
  %686 = vmatpush1.bf16.msra.mxu0 0
  %687 = vmatprep.subr.bf16.mxu0 0
  %688 = vmatpush1.bf16.msra.mxu0 0
  %689 = vmatprep.subr.bf16.mxu0 0
  %690 = vmatpush1.bf16.msra.mxu0 0
  %691 = vmatprep.subr.bf16.mxu0 0
  %692 = vmatpush1.bf16.msra.mxu0 0
  %693 = vmatprep.mubr.bf16.mxu0 0
  %694 = vmatmul.mubr.bf16.gmra.mrb[0].mxu0 %v656
  %v695 = vpop.f32.mrb[0].mxu0
  %v696 = vadd.f32 0.0, %v695
  %v697 = vpop.f32.mrb[0].mxu0
  %v698 = vpop.f32.mrb[0].mxu0
  %v699 = vadd.f32 0.0, %v698
  %v700 = vpop.f32.mrb[0].mxu0
  %701 = vmatprep.mubr.bf16.mxu0 0
  %702 = vmatmul.mubr.bf16.gmra.mrb[0].mxu0 %v659
  %v703 = vpop.f32.mrb[0].mxu0
  %v704 = vadd.f32 0.0, %v703
  %v705 = vpop.f32.mrb[0].mxu0
  %v706 = vpop.f32.mrb[0].mxu0
  %v707 = vadd.f32 0.0, %v706
  %v708 = vpop.f32.mrb[0].mxu0
  %709 = vdwg.mxu0
  %v710 = vmul.f32 %v696, %v696
  %v711 = vmul.f32 %v699, %v699
  %v712 = vmul.f32 %v704, %v704
  %v713 = vmul.f32 %v707, %v707
  %v714 = vmul.f32 %v696, %v710
  %v715 = vmul.f32 %v699, %v711
  %v716 = vmul.f32 %v704, %v712
  %v717 = vmul.f32 %v707, %v713
  %v718 = vmul.f32 %v714, 0.044715
  %v719 = vmul.f32 %v715, 0.044715
  %v720 = vmul.f32 %v716, 0.044715
  %v721 = vmul.f32 %v717, 0.044715
  %v722 = vadd.f32 %v696, %v718
  %v723 = vadd.f32 %v699, %v719
  %v724 = vadd.f32 %v704, %v720
  %v725 = vadd.f32 %v707, %v721
  %v726 = vmul.f32 %v722, 0.7978846
  %v727 = vmul.f32 %v723, 0.7978846
  %v728 = vmul.f32 %v724, 0.7978846
  %v729 = vmul.f32 %v725, 0.7978846
  %v730 = vtanh.pop %v726
  %v731 = vtanh.pop %v727
  %v732 = vtanh.pop %v728
  %v733 = vtanh.pop %v729
  %v734 = vadd.f32 %v730, 1.0
  %v735 = vadd.f32 %v731, 1.0
  %v736 = vadd.f32 %v732, 1.0
  %v737 = vadd.f32 %v733, 1.0
  %v738 = vmul.f32 %v734, 0.5
  %v739 = vmul.f32 %v735, 0.5
  %v740 = vmul.f32 %v736, 0.5
  %v741 = vmul.f32 %v737, 0.5
  %v742 = vmul.f32 %v696, %v738
  %v743 = vmul.f32 %v699, %v739
  %v744 = vmul.f32 %v704, %v740
  %v745 = vmul.f32 %v707, %v741
  %v746 = vpack.c.bf16 %v743, %v742
  %v747 = vpack.c.bf16 %v745, %v744
  %v748 = vld [vmem:[%s6] sm:$0xf]
  %v749 = vld [vmem:[%s6 + $0x4] sm:$0xf]
  %v750 = vld [vmem:[%s6 + $0x8] sm:$0xf]
  %v751 = vld [vmem:[%s6 + $0xc] sm:$0xf]
  %v752 = vld [vmem:[%s6 + $0x10] sm:$0xf]
  %v753 = vld [vmem:[%s6 + $0x14] sm:$0xf]
  %v754 = vld [vmem:[%s6 + $0x18] sm:$0xf]
  %v755 = vld [vmem:[%s6 + $0x1c] sm:$0xf]
  %v764 = vunpack.c.l.b16 %v748
  %v765 = vunpack.c.l.b16 %v749
  %v766 = vunpack.c.l.b16 %v750
  %v767 = vunpack.c.l.b16 %v751
  %v768 = vunpack.c.l.b16 %v752
  %v769 = vunpack.c.l.b16 %v753
  %v770 = vunpack.c.l.b16 %v754
  %v771 = vunpack.c.l.b16 %v755
  %v772 = vpack.c.b16 %v765, %v764
  %v773 = vpack.c.b16 %v767, %v766
  %v774 = vpack.c.b16 %v769, %v768
  %v775 = vpack.c.b16 %v771, %v770
  %vm780 = vcmask 523264
  %v782 = vsel %vm780, %v746, 0
  %v785 = vsel %vm780, %v747, 0
  %787 = vmatprep.subr.bf16.mxu0 0
  %788 = vmatpush1.bf16.msra.mxu0 %v772
  %789 = vmatprep.subr.bf16.mxu0 0
  %790 = vmatpush1.bf16.msra.mxu0 %v773
  %791 = vmatprep.subr.bf16.mxu0 0
  %792 = vmatpush1.bf16.msra.mxu0 %v774
  %793 = vmatprep.subr.bf16.mxu0 0
  %794 = vmatpush1.bf16.msra.mxu0 %v775
  %795 = vmatprep.subr.bf16.mxu0 0
  %796 = vmatpush1.bf16.msra.mxu0 0
  %797 = vmatprep.subr.bf16.mxu0 0
  %798 = vmatpush1.bf16.msra.mxu0 0
  %799 = vmatprep.subr.bf16.mxu0 0
  %800 = vmatpush1.bf16.msra.mxu0 0
  %801 = vmatprep.subr.bf16.mxu0 0
  %802 = vmatpush1.bf16.msra.mxu0 0
  %803 = vmatprep.subr.bf16.mxu0 0
  %804 = vmatpush1.bf16.msra.mxu0 0
  %805 = vmatprep.subr.bf16.mxu0 0
  %806 = vmatpush1.bf16.msra.mxu0 0
  %807 = vmatprep.subr.bf16.mxu0 0
  %808 = vmatpush1.bf16.msra.mxu0 0
  %809 = vmatprep.subr.bf16.mxu0 0
  %810 = vmatpush1.bf16.msra.mxu0 0
  %811 = vmatprep.subr.bf16.mxu0 0
  %812 = vmatpush1.bf16.msra.mxu0 0
  %813 = vmatprep.subr.bf16.mxu0 0
  %814 = vmatpush1.bf16.msra.mxu0 0
  %815 = vmatprep.subr.bf16.mxu0 0
  %816 = vmatpush1.bf16.msra.mxu0 0
  %817 = vmatprep.subr.bf16.mxu0 0
  %818 = vmatpush1.bf16.msra.mxu0 0
  %819 = vmatprep.mubr.bf16.mxu0 0
  %820 = vmatmul.mubr.bf16.gmra.mrb[0].mxu0 %v782
  %v821 = vpop.f32.mrb[0].mxu0
  %v822 = vadd.f32 0.0, %v821
  %v823 = vpop.f32.mrb[0].mxu0
  %v824 = vpop.f32.mrb[0].mxu0
  %v825 = vadd.f32 0.0, %v824
  %v826 = vpop.f32.mrb[0].mxu0
  %827 = vmatprep.mubr.bf16.mxu0 0
  %828 = vmatmul.mubr.bf16.gmra.mrb[0].mxu0 %v785
  %v829 = vpop.f32.mrb[0].mxu0
  %v830 = vadd.f32 0.0, %v829
  %v831 = vpop.f32.mrb[0].mxu0
  %v832 = vpop.f32.mrb[0].mxu0
  %v833 = vadd.f32 0.0, %v832
  %v834 = vpop.f32.mrb[0].mxu0
  %835 = vdwg.mxu0
  %v836 = vadd.f32 %v633, %v822
  %v837 = vadd.f32 %v634, %v825
  %v838 = vadd.f32 %v635, %v830
  %v839 = vadd.f32 %v636, %v833
  %v840 = vpack.c.bf16 %v837, %v836
  %v841 = vpack.c.bf16 %v839, %v838
  %v842 = vld [vmem:[%s7] sm:$0xf]
  %v843 = vld [vmem:[%s7 + $0x4] sm:$0xf]
  %v844 = vld [vmem:[%s7 + $0x8] sm:$0xf]
  %v845 = vld [vmem:[%s7 + $0xc] sm:$0xf]
  %v850 = vunpack.c.l.b16 %v842
  %v851 = vunpack.c.l.b16 %v843
  %v852 = vunpack.c.l.b16 %v844
  %v853 = vunpack.c.l.b16 %v845
  %v854 = vpack.c.b16 %v851, %v850
  %v855 = vpack.c.b16 %v853, %v852
  %v859 = vsel %vm58, %v840, 0
  %v862 = vsel %vm58, %v841, 0
  %864 = vmatprep.subr.bf16.mxu0 0
  %865 = vmatpush1.bf16.msra.mxu0 %v854
  %866 = vmatprep.subr.bf16.mxu0 0
  %867 = vmatpush1.bf16.msra.mxu0 %v855
  %868 = vmatprep.subr.bf16.mxu0 0
  %869 = vmatpush1.bf16.msra.mxu0 0
  %870 = vmatprep.subr.bf16.mxu0 0
  %871 = vmatpush1.bf16.msra.mxu0 0
  %872 = vmatprep.subr.bf16.mxu0 0
  %873 = vmatpush1.bf16.msra.mxu0 0
  %874 = vmatprep.subr.bf16.mxu0 0
  %875 = vmatpush1.bf16.msra.mxu0 0
  %876 = vmatprep.subr.bf16.mxu0 0
  %877 = vmatpush1.bf16.msra.mxu0 0
  %878 = vmatprep.subr.bf16.mxu0 0
  %879 = vmatpush1.bf16.msra.mxu0 0
  %880 = vmatprep.subr.bf16.mxu0 0
  %881 = vmatpush1.bf16.msra.mxu0 0
  %882 = vmatprep.subr.bf16.mxu0 0
  %883 = vmatpush1.bf16.msra.mxu0 0
  %884 = vmatprep.subr.bf16.mxu0 0
  %885 = vmatpush1.bf16.msra.mxu0 0
  %886 = vmatprep.subr.bf16.mxu0 0
  %887 = vmatpush1.bf16.msra.mxu0 0
  %888 = vmatprep.subr.bf16.mxu0 0
  %889 = vmatpush1.bf16.msra.mxu0 0
  %890 = vmatprep.subr.bf16.mxu0 0
  %891 = vmatpush1.bf16.msra.mxu0 0
  %892 = vmatprep.subr.bf16.mxu0 0
  %893 = vmatpush1.bf16.msra.mxu0 0
  %894 = vmatprep.subr.bf16.mxu0 0
  %895 = vmatpush1.bf16.msra.mxu0 0
  %896 = vmatprep.mubr.bf16.mxu0 0
  %897 = vmatmul.mubr.bf16.gmra.mrb[0].mxu0 %v859
  %v898 = vpop.f32.mrb[0].mxu0
  %v899 = vadd.f32 0.0, %v898
  %v900 = vpop.f32.mrb[0].mxu0
  %v901 = vpop.f32.mrb[0].mxu0
  %v902 = vadd.f32 0.0, %v901
  %v903 = vpop.f32.mrb[0].mxu0
  %904 = vmatprep.mubr.bf16.mxu0 0
  %905 = vmatmul.mubr.bf16.gmra.mrb[0].mxu0 %v862
  %v906 = vpop.f32.mrb[0].mxu0
  %v907 = vadd.f32 0.0, %v906
  %v908 = vpop.f32.mrb[0].mxu0
  %v909 = vpop.f32.mrb[0].mxu0
  %v910 = vadd.f32 0.0, %v909
  %v911 = vpop.f32.mrb[0].mxu0
  %912 = vdwg.mxu0
  %913 = vst [vmem:[%s8] sm:$0xff] %v899
  %914 = vst [vmem:[%s8 + $0x8] sm:$0xff] %v902
  %915 = vst [vmem:[%s8 + $0x10] sm:$0xff] %v907
  %916 = vst [vmem:[%s8 + $0x18] sm:$0xff] %v910
  // Predicated region
  $region34: #{prompt_diff_dann_forward.1} parent=0 // pred_check
    _
  $region35: #{prompt_diff_dann_forward.1} parent=0 // pred_check_branch
    %918 = sbr.rel (0) target = $region37
  $region36: #{prompt_diff_dann_forward.1} parent=0 // pred_region
    _
  $region37: #{prompt_diff_dann_forward.1} parent=0 // pred_fallthru
    _
  // Predicated region
  $region38: #{prompt_diff_dann_forward.1} parent=0 // pred_check
    _
  $region39: #{prompt_diff_dann_forward.1} parent=0 // pred_check_branch
    %920 = sbr.rel (0) target = $region41
  $region40: #{prompt_diff_dann_forward.1} parent=0 // pred_region
    _
  $region41: #{prompt_diff_dann_forward.1} parent=0 // pred_fallthru
    _

</llo_original>
